<compile_context>
chip_gen: v6e
topology: v6e:2x2x1
jax: 0.10.0
libtpu: 0.0.40
codegen_flags: <defaults>
</compile_context>

<pallas_src>
import numpy as np
import jax
import jax.numpy as jnp
from jax.experimental import pallas as pl
from jax.experimental.pallas import tpu as pltpu

# ---------------------------------------------------------------------------
# Config (synthetic, small, TPU-friendly): standard HER fetch critic sizes.
# ---------------------------------------------------------------------------
BATCH      = 8
OBS_DIM    = 10
GOAL_DIM   = 3
ACTION_DIM = 4
HIDDEN     = 256
ACTION_MAX = 1.0
GAMMA      = 0.98
LOG_GAMMA  = float(np.log(GAMMA))
INV_ONE_MINUS_GAMMA = float(1.0 / (1.0 - GAMMA))

PI_DIM  = OBS_DIM + GOAL_DIM        # 13 (pi_inputs width)
OUT_PAD = 128                       # lane-dense output slab (sliced to 1 outside)
MAX_BM  = 128                       # batch tile for large-batch evaluation


# ---------------------------------------------------------------------------
# Pallas kernel: fused 4-layer MLP + distributional transform.
# Weights are full-array VMEM residents; only the batch is tiled by the grid.
# ---------------------------------------------------------------------------
def distcritic_kernel(pi_ref, act_ref,
                      w1p_ref, w1a_ref, b1_ref,
                      w2_ref, b2_ref,
                      w3_ref, b3_ref,
                      w4_ref, b4_ref,
                      out_ref):
    # Layer 1 (f32): two small-K dots replace wrapper-side concat + pad-to-128.
    # 1/action_max is already folded into w1a at prep time.
    h = (jnp.dot(pi_ref[...], w1p_ref[...], preferred_element_type=jnp.float32)
         + jnp.dot(act_ref[...], w1a_ref[...], preferred_element_type=jnp.float32)
         + b1_ref[...])
    h = jnp.maximum(h, 0.0)

    # Layers 2-4: bf16 weights + bf16 activations on the MXU, f32 accumulate.
    # Bias / ReLU / exp stay in f32 on the VPU/EUP.
    h = jnp.maximum(
        jnp.dot(h.astype(jnp.bfloat16), w2_ref[...],
                preferred_element_type=jnp.float32) + b2_ref[...], 0.0)
    h = jnp.maximum(
        jnp.dot(h.astype(jnp.bfloat16), w3_ref[...],
                preferred_element_type=jnp.float32) + b3_ref[...], 0.0)
    dist = jnp.dot(h.astype(jnp.bfloat16), w4_ref[...],
                   preferred_element_type=jnp.float32) + b4_ref[...]

    # DistCritic: -(1 - gamma**dist)/(1 - gamma) == (exp(dist*log g) - 1) * 1/(1-g)
    out_ref[...] = (jnp.exp(dist * LOG_GAMMA) - 1.0) * INV_ONE_MINUS_GAMMA


def prepare_params(params):
    """One-time prep (hoisted out of the forward path): split w1, fold the
    action scale into its action slice, cast the big weights to bf16, and
    zero-pad the 1-wide head to a lane-dense 128-column slab."""
    w1 = params["w1"]
    return dict(
        w1_pi=w1[:PI_DIM, :],                                   # f32 (13, 256)
        w1_act=w1[PI_DIM:, :] * (1.0 / ACTION_MAX),             # f32 (4, 256)
        b1=params["b1"],                                        # f32 (1, 256)
        w2=params["w2"].astype(jnp.bfloat16),                   # bf16 (256, 256)
        b2=params["b2"],
        w3=params["w3"].astype(jnp.bfloat16),                   # bf16 (256, 256)
        b3=params["b3"],
        w4=jnp.pad(params["w4"], ((0, 0), (0, OUT_PAD - 1))).astype(jnp.bfloat16),
        b4=jnp.pad(params["b4"], ((0, 0), (0, OUT_PAD - 1))),   # f32 (1, 128)
    )


def dist_critic_forward(pi_inputs, actions, p):
    """Hot path: single pallas_call (no per-call padding / concat / scaling)."""
    B = pi_inputs.shape[0]
    bm = B if B <= MAX_BM else MAX_BM            # batch tile (full batch if small)
    grid = (pl.cdiv(B, bm),)

    batch_spec = lambda last: pl.BlockSpec((bm, last), lambda i: (i, 0))
    const_spec = lambda r, c: pl.BlockSpec((r, c), lambda i: (0, 0))

    out = pl.pallas_call(
        distcritic_kernel,
        out_shape=jax.ShapeDtypeStruct((B, OUT_PAD), jnp.float32),
        grid_spec=pltpu.PrefetchScalarGridSpec(
            num_scalar_prefetch=0,
            grid=grid,
            in_specs=[
                batch_spec(PI_DIM),                 # pi_inputs  (B, 13)
                batch_spec(ACTION_DIM),             # actions    (B, 4)
                const_spec(PI_DIM, HIDDEN),         # w1_pi
                const_spec(ACTION_DIM, HIDDEN),     # w1_act (pre-scaled)
                const_spec(1, HIDDEN),              # b1
                const_spec(HIDDEN, HIDDEN),         # w2 (bf16)
                const_spec(1, HIDDEN),              # b2
                const_spec(HIDDEN, HIDDEN),         # w3 (bf16)
                const_spec(1, HIDDEN),              # b3
                const_spec(HIDDEN, OUT_PAD),        # w4 padded (bf16)
                const_spec(1, OUT_PAD),             # b4 padded
            ],
            out_specs=pl.BlockSpec((bm, OUT_PAD), lambda i: (i, 0)),
        ),
        compiler_params=pltpu.CompilerParams(
            dimension_semantics=("parallel",)),     # v7x: shard batch across TCs
    )(pi_inputs, actions,
      p["w1_pi"], p["w1_act"], p["b1"],
      p["w2"], p["b2"], p["w3"], p["b3"], p["w4"], p["b4"])

    # Padded columns are exactly 0 (zero-padded w4/b4 -> exp(0)-1 == 0); keep the
    # kernel's output lane-dense and slice the true 1-wide head here.
    return out[:, :1]


# ---------------------------------------------------------------------------
# Deterministic parameter init (mimics torch.nn.Linear default U(-k, k)).
# ---------------------------------------------------------------------------
def init_params(key):
    def linear(key, fan_in, fan_out):
        kw, kb = jax.random.split(key)
        bound = 1.0 / np.sqrt(fan_in)
        w = jax.random.uniform(kw, (fan_in, fan_out), jnp.float32, -bound, bound)
        b = jax.random.uniform(kb, (1, fan_out), jnp.float32, -bound, bound)
        return w, b

    k1, k2, k3, k4 = jax.random.split(key, 4)
    w1, b1 = linear(k1, PI_DIM + ACTION_DIM, HIDDEN)
    w2, b2 = linear(k2, HIDDEN, HIDDEN)
    w3, b3 = linear(k3, HIDDEN, HIDDEN)
    w4, b4 = linear(k4, HIDDEN, 1)
    return dict(w1=w1, b1=b1, w2=w2, b2=b2, w3=w3, b3=b3, w4=w4, b4=b4)


def dist_critic_reference(pi_inputs, actions, params):
    """Pure-JAX f32 reference with the ORIGINAL (unquantized) weights."""
    x = jnp.concatenate([pi_inputs, actions / ACTION_MAX], axis=1).astype(jnp.float32)
    h = jnp.maximum(x @ params["w1"] + params["b1"], 0.0)
    h = jnp.maximum(h @ params["w2"] + params["b2"], 0.0)
    h = jnp.maximum(h @ params["w3"] + params["b3"], 0.0)
    dist = h @ params["w4"] + params["b4"]
    return -(1.0 - jnp.exp(dist * LOG_GAMMA)) / (1.0 - GAMMA)


if __name__ == "__main__":
    key = jax.random.PRNGKey(0)
    k_params, k_obs, k_act = jax.random.split(key, 3)

    params = init_params(k_params)
    prepped = jax.tree.map(jax.block_until_ready, prepare_params(params))  # one-time

    pi_inputs = jax.random.normal(k_obs, (BATCH, PI_DIM), jnp.float32)
    actions = jax.random.uniform(k_act, (BATCH, ACTION_DIM), jnp.float32, -1.0, 1.0)

    fwd = jax.jit(dist_critic_forward)
    out = jax.block_until_ready(fwd(pi_inputs, actions, prepped))

    ref = jax.block_until_ready(dist_critic_reference(pi_inputs, actions, params))
    # Tolerance loosened vs. the pure-f32 reference because w2/w3/w4 and the
    # layer-2..4 activations go through bf16 on the MXU (f32 accumulation).
    np.testing.assert_allclose(np.asarray(out), np.asarray(ref), rtol=2e-2, atol=2e-2)

    print("KERNEL_OK")
</pallas_src>

<mosaic_0001>
module attributes {stable_mosaic.version = 11 : i64} {
  func.func @distcritic_kernel(%arg0: i32, %arg1: memref<8x13xf32, #tpu.memory_space<vmem>>, %arg2: memref<8x4xf32, #tpu.memory_space<vmem>>, %arg3: memref<13x256xf32, #tpu.memory_space<vmem>>, %arg4: memref<4x256xf32, #tpu.memory_space<vmem>>, %arg5: memref<1x256xf32, #tpu.memory_space<vmem>>, %arg6: memref<256x256xbf16, #tpu.memory_space<vmem>>, %arg7: memref<1x256xf32, #tpu.memory_space<vmem>>, %arg8: memref<256x256xbf16, #tpu.memory_space<vmem>>, %arg9: memref<1x256xf32, #tpu.memory_space<vmem>>, %arg10: memref<256x128xbf16, #tpu.memory_space<vmem>>, %arg11: memref<1x128xf32, #tpu.memory_space<vmem>>, %arg12: memref<8x128xf32, #tpu.memory_space<vmem>>) attributes {dimension_semantics = [#tpu.dimension_semantics<parallel>], iteration_bounds = array<i64: 1>, scalar_prefetch = 0 : i64, scratch_operands = 0 : i64, tpu.core_type = #tpu.core_type<tc>, window_params = [{transform_indices = @transform_0, window_bounds = array<i64: 8, 13>}, {transform_indices = @transform_1, window_bounds = array<i64: 8, 4>}, {pipeline_mode = #tpu.pipeline_mode<synchronous>, transform_indices = @transform_2, window_bounds = array<i64: 13, 256>}, {pipeline_mode = #tpu.pipeline_mode<synchronous>, transform_indices = @transform_3, window_bounds = array<i64: 4, 256>}, {pipeline_mode = #tpu.pipeline_mode<synchronous>, transform_indices = @transform_4, window_bounds = array<i64: 1, 256>}, {pipeline_mode = #tpu.pipeline_mode<synchronous>, transform_indices = @transform_5, window_bounds = array<i64: 256, 256>}, {pipeline_mode = #tpu.pipeline_mode<synchronous>, transform_indices = @transform_6, window_bounds = array<i64: 1, 256>}, {pipeline_mode = #tpu.pipeline_mode<synchronous>, transform_indices = @transform_7, window_bounds = array<i64: 256, 256>}, {pipeline_mode = #tpu.pipeline_mode<synchronous>, transform_indices = @transform_8, window_bounds = array<i64: 1, 256>}, {pipeline_mode = #tpu.pipeline_mode<synchronous>, transform_indices = @transform_9, window_bounds = array<i64: 256, 128>}, {pipeline_mode = #tpu.pipeline_mode<synchronous>, transform_indices = @transform_10, window_bounds = array<i64: 1, 128>}, {transform_indices = @transform_11, window_bounds = array<i64: 8, 128>}]} {
    %c0 = arith.constant 0 : index
    %c0_0 = arith.constant 0 : index
    %0 = vector.load %arg1[%c0, %c0_0] : memref<8x13xf32, #tpu.memory_space<vmem>>, vector<8x13xf32>
    %c0_1 = arith.constant 0 : index
    %c0_2 = arith.constant 0 : index
    %1 = vector.load %arg3[%c0_1, %c0_2] : memref<13x256xf32, #tpu.memory_space<vmem>>, vector<13x256xf32>
    %cst = arith.constant dense<0.000000e+00> : vector<8x256xf32>
    %2 = tpu.matmul %0, %1, %cst {dimension_numbers = #tpu.dot_dimension_numbers<[1], [0], [0], [1], [0, 0, 1, 1], [], []>} : vector<8x13xf32>, vector<13x256xf32>, vector<8x256xf32> -> vector<8x256xf32>
    %c0_3 = arith.constant 0 : index
    %c0_4 = arith.constant 0 : index
    %3 = vector.load %arg2[%c0_3, %c0_4] : memref<8x4xf32, #tpu.memory_space<vmem>>, vector<8x4xf32>
    %c0_5 = arith.constant 0 : index
    %c0_6 = arith.constant 0 : index
    %4 = vector.load %arg4[%c0_5, %c0_6] : memref<4x256xf32, #tpu.memory_space<vmem>>, vector<4x256xf32>
    %cst_7 = arith.constant dense<0.000000e+00> : vector<8x256xf32>
    %5 = tpu.matmul %3, %4, %cst_7 {dimension_numbers = #tpu.dot_dimension_numbers<[1], [0], [0], [1], [0, 0, 1, 1], [], []>} : vector<8x4xf32>, vector<4x256xf32>, vector<8x256xf32> -> vector<8x256xf32>
    %6 = arith.addf %2, %5 : vector<8x256xf32>
    %c0_8 = arith.constant 0 : index
    %c0_9 = arith.constant 0 : index
    %7 = vector.load %arg5[%c0_8, %c0_9] : memref<1x256xf32, #tpu.memory_space<vmem>>, vector<1x256xf32>
    %8 = vector.broadcast %7 : vector<1x256xf32> to vector<8x256xf32>
    %9 = arith.addf %6, %8 : vector<8x256xf32>
    %cst_10 = arith.constant 0.000000e+00 : f32
    %10 = vector.broadcast %cst_10 : f32 to vector<8x256xf32>
    %11 = arith.maximumf %9, %10 : vector<8x256xf32>
    %12 = arith.truncf %11 : vector<8x256xf32> to vector<8x256xbf16>
    %c0_11 = arith.constant 0 : index
    %c0_12 = arith.constant 0 : index
    %13 = vector.load %arg6[%c0_11, %c0_12] : memref<256x256xbf16, #tpu.memory_space<vmem>>, vector<256x256xbf16>
    %cst_13 = arith.constant dense<0.000000e+00> : vector<8x256xf32>
    %14 = tpu.matmul %12, %13, %cst_13 {dimension_numbers = #tpu.dot_dimension_numbers<[1], [0], [0], [1], [0, 0, 1, 1], [], []>} : vector<8x256xbf16>, vector<256x256xbf16>, vector<8x256xf32> -> vector<8x256xf32>
    %c0_14 = arith.constant 0 : index
    %c0_15 = arith.constant 0 : index
    %15 = vector.load %arg7[%c0_14, %c0_15] : memref<1x256xf32, #tpu.memory_space<vmem>>, vector<1x256xf32>
    %16 = vector.broadcast %15 : vector<1x256xf32> to vector<8x256xf32>
    %17 = arith.addf %14, %16 : vector<8x256xf32>
    %cst_16 = arith.constant 0.000000e+00 : f32
    %18 = vector.broadcast %cst_16 : f32 to vector<8x256xf32>
    %19 = arith.maximumf %17, %18 : vector<8x256xf32>
    %20 = arith.truncf %19 : vector<8x256xf32> to vector<8x256xbf16>
    %c0_17 = arith.constant 0 : index
    %c0_18 = arith.constant 0 : index
    %21 = vector.load %arg8[%c0_17, %c0_18] : memref<256x256xbf16, #tpu.memory_space<vmem>>, vector<256x256xbf16>
    %cst_19 = arith.constant dense<0.000000e+00> : vector<8x256xf32>
    %22 = tpu.matmul %20, %21, %cst_19 {dimension_numbers = #tpu.dot_dimension_numbers<[1], [0], [0], [1], [0, 0, 1, 1], [], []>} : vector<8x256xbf16>, vector<256x256xbf16>, vector<8x256xf32> -> vector<8x256xf32>
    %c0_20 = arith.constant 0 : index
    %c0_21 = arith.constant 0 : index
    %23 = vector.load %arg9[%c0_20, %c0_21] : memref<1x256xf32, #tpu.memory_space<vmem>>, vector<1x256xf32>
    %24 = vector.broadcast %23 : vector<1x256xf32> to vector<8x256xf32>
    %25 = arith.addf %22, %24 : vector<8x256xf32>
    %cst_22 = arith.constant 0.000000e+00 : f32
    %26 = vector.broadcast %cst_22 : f32 to vector<8x256xf32>
    %27 = arith.maximumf %25, %26 : vector<8x256xf32>
    %28 = arith.truncf %27 : vector<8x256xf32> to vector<8x256xbf16>
    %c0_23 = arith.constant 0 : index
    %c0_24 = arith.constant 0 : index
    %29 = vector.load %arg10[%c0_23, %c0_24] : memref<256x128xbf16, #tpu.memory_space<vmem>>, vector<256x128xbf16>
    %cst_25 = arith.constant dense<0.000000e+00> : vector<8x128xf32>
    %30 = tpu.matmul %28, %29, %cst_25 {dimension_numbers = #tpu.dot_dimension_numbers<[1], [0], [0], [1], [0, 0, 1, 1], [], []>} : vector<8x256xbf16>, vector<256x128xbf16>, vector<8x128xf32> -> vector<8x128xf32>
    %c0_26 = arith.constant 0 : index
    %c0_27 = arith.constant 0 : index
    %31 = vector.load %arg11[%c0_26, %c0_27] : memref<1x128xf32, #tpu.memory_space<vmem>>, vector<1x128xf32>
    %32 = vector.broadcast %31 : vector<1x128xf32> to vector<8x128xf32>
    %33 = arith.addf %30, %32 : vector<8x128xf32>
    %cst_28 = arith.constant -0.0202027075 : f32
    %34 = vector.broadcast %cst_28 : f32 to vector<8x128xf32>
    %35 = arith.mulf %33, %34 : vector<8x128xf32>
    %36 = math.exp %35 : vector<8x128xf32>
    %cst_29 = arith.constant 1.000000e+00 : f32
    %37 = vector.broadcast %cst_29 : f32 to vector<8x128xf32>
    %38 = arith.subf %36, %37 : vector<8x128xf32>
    %cst_30 = arith.constant 5.000000e+01 : f32
    %39 = vector.broadcast %cst_30 : f32 to vector<8x128xf32>
    %40 = arith.mulf %38, %39 : vector<8x128xf32>
    %c0_31 = arith.constant 0 : index
    %c0_32 = arith.constant 0 : index
    %41 = vector.load %arg12[%c0_31, %c0_32] : memref<8x128xf32, #tpu.memory_space<vmem>>, vector<8x128xf32>
    tpu.vector_store %arg12[%c0_31, %c0_32], %40 {strides = array<i32>} : memref<8x128xf32, #tpu.memory_space<vmem>>, vector<8x128xf32>,
    return
  }
  func.func @transform_0(%arg0: i32) -> (i32, i32) {
    %c0_i32 = arith.constant 0 : i32
    %c0_i32_0 = arith.constant 0 : i32
    return %arg0, %c0_i32 : i32, i32
  }
  func.func @transform_1(%arg0: i32) -> (i32, i32) {
    %c0_i32 = arith.constant 0 : i32
    %c0_i32_0 = arith.constant 0 : i32
    return %arg0, %c0_i32 : i32, i32
  }
  func.func @transform_2(%arg0: i32) -> (i32, i32) {
    %c0_i32 = arith.constant 0 : i32
    %c0_i32_0 = arith.constant 0 : i32
    %c0_i32_1 = arith.constant 0 : i32
    return %c0_i32, %c0_i32_0 : i32, i32
  }
  func.func @transform_3(%arg0: i32) -> (i32, i32) {
    %c0_i32 = arith.constant 0 : i32
    %c0_i32_0 = arith.constant 0 : i32
    %c0_i32_1 = arith.constant 0 : i32
    return %c0_i32, %c0_i32_0 : i32, i32
  }
  func.func @transform_4(%arg0: i32) -> (i32, i32) {
    %c0_i32 = arith.constant 0 : i32
    %c0_i32_0 = arith.constant 0 : i32
    %c0_i32_1 = arith.constant 0 : i32
    return %c0_i32, %c0_i32_0 : i32, i32
  }
  func.func @transform_5(%arg0: i32) -> (i32, i32) {
    %c0_i32 = arith.constant 0 : i32
    %c0_i32_0 = arith.constant 0 : i32
    %c0_i32_1 = arith.constant 0 : i32
    return %c0_i32, %c0_i32_0 : i32, i32
  }
  func.func @transform_6(%arg0: i32) -> (i32, i32) {
    %c0_i32 = arith.constant 0 : i32
    %c0_i32_0 = arith.constant 0 : i32
    %c0_i32_1 = arith.constant 0 : i32
    return %c0_i32, %c0_i32_0 : i32, i32
  }
  func.func @transform_7(%arg0: i32) -> (i32, i32) {
    %c0_i32 = arith.constant 0 : i32
    %c0_i32_0 = arith.constant 0 : i32
    %c0_i32_1 = arith.constant 0 : i32
    return %c0_i32, %c0_i32_0 : i32, i32
  }
  func.func @transform_8(%arg0: i32) -> (i32, i32) {
    %c0_i32 = arith.constant 0 : i32
    %c0_i32_0 = arith.constant 0 : i32
    %c0_i32_1 = arith.constant 0 : i32
    return %c0_i32, %c0_i32_0 : i32, i32
  }
  func.func @transform_9(%arg0: i32) -> (i32, i32) {
    %c0_i32 = arith.constant 0 : i32
    %c0_i32_0 = arith.constant 0 : i32
    %c0_i32_1 = arith.constant 0 : i32
    return %c0_i32, %c0_i32_0 : i32, i32
  }
  func.func @transform_10(%arg0: i32) -> (i32, i32) {
    %c0_i32 = arith.constant 0 : i32
    %c0_i32_0 = arith.constant 0 : i32
    %c0_i32_1 = arith.constant 0 : i32
    return %c0_i32, %c0_i32_0 : i32, i32
  }
  func.func @transform_11(%arg0: i32) -> (i32, i32) {
    %c0_i32 = arith.constant 0 : i32
    %c0_i32_0 = arith.constant 0 : i32
    return %arg0, %c0_i32 : i32, i32
  }
}

</mosaic_0001>

<llo_original>
// kernel: dist_critic_forward.1
$region0: #{dist_critic_forward.1}
  #allocation0 [shape = 'u32[]', space=smem, size = 0x4, offset = 0x4, fixed_abs, tag = 'smem constant byte address 0x4 - core index']
  #allocation1 [shape = 'u32[144,128]{1,0:T(1,128)}', space=vmem, size = 0x12000, scoped, tag = 'internal scratch']
  %s0 = inlined_call_operand.vmem [shape: f32[8,13], index: 0, kind: input, shape index: {}]
  %s1 = inlined_call_operand.vmem [shape: f32[8,4], index: 1, kind: input, shape index: {}]
  %s2 = inlined_call_operand.hbm [shape: f32[13,256], index: 2, kind: input, shape index: {}]
  %s3 = inlined_call_operand.vmem [shape: f32[4,256], index: 3, kind: input, shape index: {}]
  %s4 = inlined_call_operand.hbm [shape: f32[1,256], index: 4, kind: input, shape index: {}]
  %s5 = inlined_call_operand.hbm [shape: bf16[256,256], index: 5, kind: input, shape index: {}]
  %s6 = inlined_call_operand.hbm [shape: f32[1,256], index: 6, kind: input, shape index: {}]
  %s7 = inlined_call_operand.hbm [shape: bf16[256,256], index: 7, kind: input, shape index: {}]
  %s8 = inlined_call_operand.vmem [shape: f32[1,256], index: 8, kind: input, shape index: {}]
  %s9 = inlined_call_operand.hbm [shape: bf16[256,128], index: 9, kind: input, shape index: {}]
  %s10 = inlined_call_operand.vmem [shape: f32[1,128], index: 10, kind: input, shape index: {}]
  %s11 = inlined_call_operand.vmem [shape: f32[8,128], index: 11, kind: output, shape index: {}]
  %s12 = sld [smem:[#allocation0]]
  $region78: #{dist_critic_forward.1} parent=0
    _
  %s14 = ssub.s32 1, %s12
  %s15 = scalar_select 0, %s14, %s12
  $region1: #{dist_critic_forward.1} parent=0
    #allocation2 [shape = 'u8[16384]{0}', space=vmem, size = 0x4000, scoped, tag = 'input window, operand 2, single buffered']
    #allocation3 [shape = 's32[1]{0}', space=sflag, size = 0x4, scoped, tag = 'scoped memory for dist_critic_forward.1']
    #allocation4 [shape = 'u8[1024]{0}', space=vmem, size = 0x400, scoped, tag = 'input window, operand 4, single buffered']
    #allocation5 [shape = 's32[1]{0}', space=sflag, size = 0x4, scoped, tag = 'scoped memory for dist_critic_forward.1']
    #allocation6 [shape = 'u8[131072]{0}', space=vmem, size = 0x20000, scoped, tag = 'input window, operand 5, single buffered']
    #allocation7 [shape = 'u8[1024]{0}', space=vmem, size = 0x400, scoped, tag = 'input window, operand 6, single buffered']
    #allocation8 [shape = 's32[1]{0}', space=sflag, size = 0x4, scoped, tag = 'scoped memory for dist_critic_forward.1']
    #allocation9 [shape = 'u8[131072]{0}', space=vmem, size = 0x20000, scoped, tag = 'input window, operand 7, single buffered']
    #allocation10 [shape = 'u8[65536]{0}', space=vmem, size = 0x10000, scoped, tag = 'input window, operand 9, single buffered']
    #allocation11 [shape = 's32[1]{0}', space=sflag, size = 0x4, scoped, tag = 'scoped memory for dist_critic_forward.1']
    %16 = vsyncpa [#allocation3], 0
    %17 = vsyncpa [#allocation5], 0
    %18 = vsyncpa [#allocation8], 0
    %19 = vsyncpa [#allocation11], 0
    // Predicated region
    $region2: #{dist_critic_forward.1} parent=1 // pred_check
      _
    $region3: #{dist_critic_forward.1} parent=1 // pred_check_branch
      %21 = sbr.rel (0) target = $region5
    $region4: #{dist_critic_forward.1} parent=1 // pred_region
      _
    $region5: #{dist_critic_forward.1} parent=1 // pred_fallthru
      _
    // Predicated region
    $region6: #{dist_critic_forward.1} parent=1 // pred_check
      _
    $region7: #{dist_critic_forward.1} parent=1 // pred_check_branch
      %23 = sbr.rel (0) target = $region9
    $region8: #{dist_critic_forward.1} parent=1 // pred_region
      _
    $region9: #{dist_critic_forward.1} parent=1 // pred_fallthru
      _
    // Predicated region
    $region10: #{dist_critic_forward.1} parent=1 // pred_check
      _
    $region11: #{dist_critic_forward.1} parent=1 // pred_check_branch
      %25 = sbr.rel (0) target = $region13
    $region12: #{dist_critic_forward.1} parent=1 // pred_region
      %s27 = ssub.s32 512, 512
      %28 = vsyncadd [#allocation3], %s27
      %s29 = sshll.u32 [#allocation2], 4
      %s30 = int_to_ptr.vmem [resolvable:$true] %s29
      %35 = dma.hbm_to_vmem [thread:$0]  %s2, 512, %s30, [#allocation3], 256, 256, 16
    $region13: #{dist_critic_forward.1} parent=1 // pred_fallthru
      _
    // Predicated region
    $region14: #{dist_critic_forward.1} parent=1 // pred_check
      _
    $region15: #{dist_critic_forward.1} parent=1 // pred_check_branch
      %37 = sbr.rel (0) target = $region17
    $region16: #{dist_critic_forward.1} parent=1 // pred_region
      _
    $region17: #{dist_critic_forward.1} parent=1 // pred_fallthru
      _
    // Predicated region
    $region18: #{dist_critic_forward.1} parent=1 // pred_check
      _
    $region19: #{dist_critic_forward.1} parent=1 // pred_check_branch
      %39 = sbr.rel (0) target = $region21
    $region20: #{dist_critic_forward.1} parent=1 // pred_region
      %s41 = ssub.s32 32, 32
      %42 = vsyncadd [#allocation5], %s41
      %s44 = sshll.u32 [#allocation4], 4
      %s45 = int_to_ptr.vmem [resolvable:$true] %s44
      %47 = dma.hbm_to_vmem [thread:$0]  %s4, 32, %s45, [#allocation5]
    $region21: #{dist_critic_forward.1} parent=1 // pred_fallthru
      _
    // Predicated region
    $region22: #{dist_critic_forward.1} parent=1 // pred_check
      _
    $region23: #{dist_critic_forward.1} parent=1 // pred_check_branch
      %49 = sbr.rel (0) target = $region25
    $region24: #{dist_critic_forward.1} parent=1 // pred_region
      %s51 = ssub.s32 4096, 4096
      %52 = vsyncadd [#allocation5], %s51
      %s53 = sshll.u32 [#allocation6], 4
      %s54 = int_to_ptr.vmem [resolvable:$true] %s53
      %59 = dma.hbm_to_vmem [thread:$0]  %s5, 4096, %s54, [#allocation5], 128, 128, 8
    $region25: #{dist_critic_forward.1} parent=1 // pred_fallthru
      _
    // Predicated region
    $region26: #{dist_critic_forward.1} parent=1 // pred_check
      _
    $region27: #{dist_critic_forward.1} parent=1 // pred_check_branch
      %61 = sbr.rel (0) target = $region29
    $region28: #{dist_critic_forward.1} parent=1 // pred_region
      %s63 = ssub.s32 32, 32
      %64 = vsyncadd [#allocation8], %s63
      %s66 = sshll.u32 [#allocation7], 4
      %s67 = int_to_ptr.vmem [resolvable:$true] %s66
      %69 = dma.hbm_to_vmem [thread:$0]  %s6, 32, %s67, [#allocation8]
    $region29: #{dist_critic_forward.1} parent=1 // pred_fallthru
      _
    // Predicated region
    $region30: #{dist_critic_forward.1} parent=1 // pred_check
      _
    $region31: #{dist_critic_forward.1} parent=1 // pred_check_branch
      %71 = sbr.rel (0) target = $region33
    $region32: #{dist_critic_forward.1} parent=1 // pred_region
      %s73 = ssub.s32 4096, 4096
      %74 = vsyncadd [#allocation8], %s73
      %s75 = sshll.u32 [#allocation9], 4
      %s76 = int_to_ptr.vmem [resolvable:$true] %s75
      %81 = dma.hbm_to_vmem [thread:$0]  %s7, 4096, %s76, [#allocation8], 128, 128, 8
    $region33: #{dist_critic_forward.1} parent=1 // pred_fallthru
      _
    // Predicated region
    $region34: #{dist_critic_forward.1} parent=1 // pred_check
      _
    $region35: #{dist_critic_forward.1} parent=1 // pred_check_branch
      %83 = sbr.rel (0) target = $region37
    $region36: #{dist_critic_forward.1} parent=1 // pred_region
      _
    $region37: #{dist_critic_forward.1} parent=1 // pred_fallthru
      _
    // Predicated region
    $region38: #{dist_critic_forward.1} parent=1 // pred_check
      _
    $region39: #{dist_critic_forward.1} parent=1 // pred_check_branch
      %85 = sbr.rel (0) target = $region41
    $region40: #{dist_critic_forward.1} parent=1 // pred_region
      %s87 = ssub.s32 2048, 2048
      %88 = vsyncadd [#allocation11], %s87
      %s89 = sshll.u32 [#allocation10], 4
      %s90 = int_to_ptr.vmem [resolvable:$true] %s89
      %95 = dma.hbm_to_vmem [thread:$0]  %s9, 2048, %s90, [#allocation11], 64, 64, 4
    $region41: #{dist_critic_forward.1} parent=1 // pred_fallthru
      _
    // Predicated region
    $region42: #{dist_critic_forward.1} parent=1 // pred_check
      _
    $region43: #{dist_critic_forward.1} parent=1 // pred_check_branch
      %97 = sbr.rel (0) target = $region45
    $region44: #{dist_critic_forward.1} parent=1 // pred_region
      _
    $region45: #{dist_critic_forward.1} parent=1 // pred_fallthru
      _
    // Predicated region
    $region46: #{dist_critic_forward.1} parent=1 // pred_check
      _
    $region47: #{dist_critic_forward.1} parent=1 // pred_check_branch
      %99 = sbr.rel (0) target = $region49
    $region48: #{dist_critic_forward.1} parent=1 // pred_region
      %100 = dma.done [#allocation3], 512
    $region49: #{dist_critic_forward.1} parent=1 // pred_fallthru
      _
    // Predicated region
    $region50: #{dist_critic_forward.1} parent=1 // pred_check
      _
    $region51: #{dist_critic_forward.1} parent=1 // pred_check_branch
      %102 = sbr.rel (0) target = $region53
    $region52: #{dist_critic_forward.1} parent=1 // pred_region
      %103 = dma.done [#allocation5], 32
    $region53: #{dist_critic_forward.1} parent=1 // pred_fallthru
      _
    // Predicated region
    $region54: #{dist_critic_forward.1} parent=1 // pred_check
      _
    $region55: #{dist_critic_forward.1} parent=1 // pred_check_branch
      %105 = sbr.rel (0) target = $region57
    $region56: #{dist_critic_forward.1} parent=1 // pred_region
      %106 = dma.done [#allocation5], 4096
    $region57: #{dist_critic_forward.1} parent=1 // pred_fallthru
      _
    // Predicated region
    $region58: #{dist_critic_forward.1} parent=1 // pred_check
      _
    $region59: #{dist_critic_forward.1} parent=1 // pred_check_branch
      %108 = sbr.rel (0) target = $region61
    $region60: #{dist_critic_forward.1} parent=1 // pred_region
      %109 = dma.done [#allocation8], 32
    $region61: #{dist_critic_forward.1} parent=1 // pred_fallthru
      _
    // Predicated region
    $region62: #{dist_critic_forward.1} parent=1 // pred_check
      _
    $region63: #{dist_critic_forward.1} parent=1 // pred_check_branch
      %111 = sbr.rel (0) target = $region65
    $region64: #{dist_critic_forward.1} parent=1 // pred_region
      %112 = dma.done [#allocation8], 4096
    $region65: #{dist_critic_forward.1} parent=1 // pred_fallthru
      _
    // Predicated region
    $region66: #{dist_critic_forward.1} parent=1 // pred_check
      _
    $region67: #{dist_critic_forward.1} parent=1 // pred_check_branch
      %114 = sbr.rel (0) target = $region69
    $region68: #{dist_critic_forward.1} parent=1 // pred_region
      %115 = dma.done [#allocation11], 2048
    $region69: #{dist_critic_forward.1} parent=1 // pred_fallthru
      _
    %v117 = vld [vmem:[%s0] sm:$0xff]
    %v118 = vld [vmem:[#allocation2] sm:$0xff]
    %v119 = vld [vmem:[#allocation2 + $0x8] sm:$0xff]
    %v120 = vld [vmem:[#allocation2 + $0x10] sm:$0x1f]
    %v121 = vld [vmem:[#allocation2 + $0x18] sm:$0x1f]
    %v122 = vld [vmem:[%s1] sm:$0xff]
    %v123 = vld [vmem:[%s3] sm:$0xff]
    %v125 = vcombine.high %v123, %v123
    %vm126 = vcmask 31744
    %v128 = vsel %vm126, %v122, 0
    %vm130 = vcmask 1043456
    %v131 = vsel %vm130, %v123, 0
    %v133 = vsel %vm130, %v125, 0
    %135 = vmatprep.subr.mxu0 0.0
    %136 = vmatpush1.msra.mxu0 0.0
    %137 = vmatprep.subr.mxu0 0.0
    %138 = vmatpush1.msra.mxu0 0.0
    %139 = vmatprep.subr.mxu0 0.0
    %140 = vmatpush1.msra.mxu0 0.0
    %141 = vmatprep.subr.mxu0 0.0
    %142 = vmatpush1.msra.mxu0 0.0
    %143 = vmatprep.subr.mxu0 0.0
    %144 = vmatpush1.msra.mxu0 0.0
    %145 = vmatprep.subr.mxu0 0.0
    %146 = vmatpush1.msra.mxu0 0.0
    %147 = vmatprep.subr.mxu0 0.0
    %148 = vmatpush1.msra.mxu0 0.0
    %149 = vmatprep.subr.mxu0 0.0
    %150 = vmatpush1.msra.mxu0 0.0
    %151 = vmatprep.subr.mxu0 0.0
    %152 = vmatpush1.msra.mxu0 0.0
    %153 = vmatprep.subr.mxu0 0.0
    %154 = vmatpush1.msra.mxu0 0.0
    %155 = vmatprep.subr.mxu0 0.0
    %156 = vmatpush1.msra.mxu0 0.0
    %157 = vmatprep.subr.mxu0 0.0
    %158 = vmatpush1.msra.mxu0 0.0
    %159 = vmatprep.subr.mxu0 0.0
    %160 = vmatpush1.msra.mxu0 0.0
    %161 = vmatprep.subr.mxu0 0.0
    %162 = vmatpush1.msra.mxu0 0.0
    %163 = vmatprep.subr.mxu0 0.0
    %164 = vmatpush1.msra.mxu0 0.0
    %165 = vmatprep.subr.mxu0 %v133
    %166 = vmatpush1.msra.mxu0 %v131
    %167 = vmatprep.subr.mxu0 0.0
    %168 = vmatpush2.msra.mxu0 0.0
    %169 = vmatprep.subr.mxu0 0.0
    %170 = vmatpush2.msra.mxu0 0.0
    %171 = vmatprep.subr.mxu0 0.0
    %172 = vmatpush2.msra.mxu0 0.0
    %173 = vmatprep.subr.mxu0 0.0
    %174 = vmatpush2.msra.mxu0 0.0
    %175 = vmatprep.subr.mxu0 0.0
    %176 = vmatpush2.msra.mxu0 0.0
    %177 = vmatprep.subr.mxu0 0.0
    %178 = vmatpush2.msra.mxu0 0.0
    %179 = vmatprep.subr.mxu0 0.0
    %180 = vmatpush2.msra.mxu0 0.0
    %181 = vmatprep.subr.mxu0 0.0
    %182 = vmatpush2.msra.mxu0 0.0
    %183 = vmatprep.subr.mxu0 0.0
    %184 = vmatpush2.msra.mxu0 0.0
    %185 = vmatprep.subr.mxu0 0.0
    %186 = vmatpush2.msra.mxu0 0.0
    %187 = vmatprep.subr.mxu0 0.0
    %188 = vmatpush2.msra.mxu0 0.0
    %189 = vmatprep.subr.mxu0 0.0
    %190 = vmatpush2.msra.mxu0 0.0
    %191 = vmatprep.subr.mxu0 0.0
    %192 = vmatpush2.msra.mxu0 0.0
    %193 = vmatprep.subr.mxu0 0.0
    %194 = vmatpush2.msra.mxu0 0.0
    %195 = vmatprep.subr.mxu0 0.0
    %196 = vmatpush2.msra.mxu0 0.0
    %197 = vmatprep.subr.mxu0 0.0
    %198 = vmatpush2.msra.mxu0 0.0
    %199 = vmatprep.mubr.f32.mxu0 0.0
    %200 = vmatmul.mubr.f32.gmra.mxu0 %v128
    %v201 = vpop.f32.mrf.mxu0
    %v202 = vadd.f32 0.0, %v201
    %v203 = vpop.f32.mrf.mxu0
    %v204 = vadd.f32 0.0, %v203
    %205 = vdwg.mxu0
    %vm206 = vcmask 105472
    %v208 = vsel %vm206, %v117, 0
    %vm210 = vcmask 1044480
    %v212 = vsel %vm210, %v120, 0
    %v215 = vsel %vm210, %v121, 0
    %217 = vmatprep.subr.mxu0 0.0
    %218 = vmatpush1.msra.mxu0 0.0
    %219 = vmatprep.subr.mxu0 0.0
    %220 = vmatpush1.msra.mxu0 0.0
    %221 = vmatprep.subr.mxu0 0.0
    %222 = vmatpush1.msra.mxu0 0.0
    %223 = vmatprep.subr.mxu0 0.0
    %224 = vmatpush1.msra.mxu0 0.0
    %225 = vmatprep.subr.mxu0 0.0
    %226 = vmatpush1.msra.mxu0 0.0
    %227 = vmatprep.subr.mxu0 0.0
    %228 = vmatpush1.msra.mxu0 0.0
    %229 = vmatprep.subr.mxu0 0.0
    %230 = vmatpush1.msra.mxu0 0.0
    %231 = vmatprep.subr.mxu0 0.0
    %232 = vmatpush1.msra.mxu0 0.0
    %233 = vmatprep.subr.mxu0 0.0
    %234 = vmatpush1.msra.mxu0 0.0
    %235 = vmatprep.subr.mxu0 0.0
    %236 = vmatpush1.msra.mxu0 0.0
    %237 = vmatprep.subr.mxu0 0.0
    %238 = vmatpush1.msra.mxu0 0.0
    %239 = vmatprep.subr.mxu0 0.0
    %240 = vmatpush1.msra.mxu0 0.0
    %241 = vmatprep.subr.mxu0 0.0
    %242 = vmatpush1.msra.mxu0 0.0
    %243 = vmatprep.subr.mxu0 0.0
    %244 = vmatpush1.msra.mxu0 0.0
    %245 = vmatprep.subr.mxu0 %v215
    %246 = vmatpush1.msra.mxu0 %v212
    %247 = vmatprep.subr.mxu0 %v119
    %248 = vmatpush1.msra.mxu0 %v118
    %249 = vmatprep.subr.mxu0 0.0
    %250 = vmatpush2.msra.mxu0 0.0
    %251 = vmatprep.subr.mxu0 0.0
    %252 = vmatpush2.msra.mxu0 0.0
    %253 = vmatprep.subr.mxu0 0.0
    %254 = vmatpush2.msra.mxu0 0.0
    %255 = vmatprep.subr.mxu0 0.0
    %256 = vmatpush2.msra.mxu0 0.0
    %257 = vmatprep.subr.mxu0 0.0
    %258 = vmatpush2.msra.mxu0 0.0
    %259 = vmatprep.subr.mxu0 0.0
    %260 = vmatpush2.msra.mxu0 0.0
    %261 = vmatprep.subr.mxu0 0.0
    %262 = vmatpush2.msra.mxu0 0.0
    %263 = vmatprep.subr.mxu0 0.0
    %264 = vmatpush2.msra.mxu0 0.0
    %265 = vmatprep.subr.mxu0 0.0
    %266 = vmatpush2.msra.mxu0 0.0
    %267 = vmatprep.subr.mxu0 0.0
    %268 = vmatpush2.msra.mxu0 0.0
    %269 = vmatprep.subr.mxu0 0.0
    %270 = vmatpush2.msra.mxu0 0.0
    %271 = vmatprep.subr.mxu0 0.0
    %272 = vmatpush2.msra.mxu0 0.0
    %273 = vmatprep.subr.mxu0 0.0
    %274 = vmatpush2.msra.mxu0 0.0
    %275 = vmatprep.subr.mxu0 0.0
    %276 = vmatpush2.msra.mxu0 0.0
    %277 = vmatprep.subr.mxu0 0.0
    %278 = vmatpush2.msra.mxu0 0.0
    %279 = vmatprep.subr.mxu0 0.0
    %280 = vmatpush2.msra.mxu0 0.0
    %281 = vmatprep.mubr.f32.mxu0 0.0
    %282 = vmatmul.mubr.f32.gmra.mxu0 %v208
    %v283 = vpop.f32.mrf.mxu0
    %v284 = vadd.f32 %v202, %v283
    %v285 = vpop.f32.mrf.mxu0
    %v286 = vadd.f32 %v204, %v285
    %287 = vdwg.mxu0
    %v288 = vld [vmem:[#allocation4] sm:$0x3]
    %v290 = vlaneseq
    %v291 = vshrl.u32 %v290, 7
    %v292 = vsub.s32 0, %v291
    %v293 = vrot.slane %v288, %v292
    %v294 = vlaneseq
    %v295 = vshrl.u32 %v294, 7
    %v296 = vsub.s32 1, %v295
    %v297 = vrot.slane %v288, %v296
    %v300 = vadd.f32 %v284, %v293
    %v301 = vadd.f32 %v286, %v297
    %v302 = vmax.f32 %v300, 0.0
    %v303 = vmax.f32 %v301, 0.0
    %v304 = vpack.c.bf16 %v302, %v302
    %v305 = vpack.c.bf16 %v303, %v303
    %v306 = vld [vmem:[#allocation6] sm:$0xff]
    %v307 = vld [vmem:[#allocation6 + $0x8] sm:$0xff]
    %v308 = vld [vmem:[#allocation6 + $0x10] sm:$0xff]
    %v309 = vld [vmem:[#allocation6 + $0x18] sm:$0xff]
    %v310 = vld [vmem:[#allocation6 + $0x20] sm:$0xff]
    %v311 = vld [vmem:[#allocation6 + $0x28] sm:$0xff]
    %v312 = vld [vmem:[#allocation6 + $0x30] sm:$0xff]
    %v313 = vld [vmem:[#allocation6 + $0x38] sm:$0xff]
    %v314 = vld [vmem:[#allocation6 + $0x40] sm:$0xff]
    %v315 = vld [vmem:[#allocation6 + $0x48] sm:$0xff]
    %v316 = vld [vmem:[#allocation6 + $0x50] sm:$0xff]
    %v317 = vld [vmem:[#allocation6 + $0x58] sm:$0xff]
    %v318 = vld [vmem:[#allocation6 + $0x60] sm:$0xff]
    %v319 = vld [vmem:[#allocation6 + $0x68] sm:$0xff]
    %v320 = vld [vmem:[#allocation6 + $0x70] sm:$0xff]
    %v321 = vld [vmem:[#allocation6 + $0x78] sm:$0xff]
    %v322 = vld [vmem:[#allocation6 + $0x80] sm:$0xff]
    %v323 = vld [vmem:[#allocation6 + $0x88] sm:$0xff]
    %v324 = vld [vmem:[#allocation6 + $0x90] sm:$0xff]
    %v325 = vld [vmem:[#allocation6 + $0x98] sm:$0xff]
    %v326 = vld [vmem:[#allocation6 + $0xa0] sm:$0xff]
    %v327 = vld [vmem:[#allocation6 + $0xa8] sm:$0xff]
    %v328 = vld [vmem:[#allocation6 + $0xb0] sm:$0xff]
    %v329 = vld [vmem:[#allocation6 + $0xb8] sm:$0xff]
    %v330 = vld [vmem:[#allocation6 + $0xc0] sm:$0xff]
    %v331 = vld [vmem:[#allocation6 + $0xc8] sm:$0xff]
    %v332 = vld [vmem:[#allocation6 + $0xd0] sm:$0xff]
    %v333 = vld [vmem:[#allocation6 + $0xd8] sm:$0xff]
    %v334 = vld [vmem:[#allocation6 + $0xe0] sm:$0xff]
    %v335 = vld [vmem:[#allocation6 + $0xe8] sm:$0xff]
    %v336 = vld [vmem:[#allocation6 + $0xf0] sm:$0xff]
    %v337 = vld [vmem:[#allocation6 + $0xf8] sm:$0xff]
    %v338 = vld [vmem:[#allocation7] sm:$0x3]
    %v340 = vlaneseq
    %v341 = vshrl.u32 %v340, 7
    %v342 = vsub.s32 0, %v341
    %v343 = vrot.slane %v338, %v342
    %v344 = vlaneseq
    %v345 = vshrl.u32 %v344, 7
    %v346 = vsub.s32 1, %v345
    %v347 = vrot.slane %v338, %v346
    %v382 = vunpack.c.l.b16 %v306
    %v383 = vunpack.c.h.b16 %v306
    %v384 = vunpack.c.l.b16 %v307
    %v385 = vunpack.c.h.b16 %v307
    %v386 = vunpack.c.l.b16 %v308
    %v387 = vunpack.c.h.b16 %v308
    %v388 = vunpack.c.l.b16 %v309
    %v389 = vunpack.c.h.b16 %v309
    %v390 = vunpack.c.l.b16 %v310
    %v391 = vunpack.c.h.b16 %v310
    %v392 = vunpack.c.l.b16 %v311
    %v393 = vunpack.c.h.b16 %v311
    %v394 = vunpack.c.l.b16 %v312
    %v395 = vunpack.c.h.b16 %v312
    %v396 = vunpack.c.l.b16 %v313
    %v397 = vunpack.c.h.b16 %v313
    %v398 = vunpack.c.l.b16 %v314
    %v399 = vunpack.c.h.b16 %v314
    %v400 = vunpack.c.l.b16 %v315
    %v401 = vunpack.c.h.b16 %v315
    %v402 = vunpack.c.l.b16 %v316
    %v403 = vunpack.c.h.b16 %v316
    %v404 = vunpack.c.l.b16 %v317
    %v405 = vunpack.c.h.b16 %v317
    %v406 = vunpack.c.l.b16 %v318
    %v407 = vunpack.c.h.b16 %v318
    %v408 = vunpack.c.l.b16 %v319
    %v409 = vunpack.c.h.b16 %v319
    %v410 = vunpack.c.l.b16 %v320
    %v411 = vunpack.c.h.b16 %v320
    %v412 = vunpack.c.l.b16 %v321
    %v413 = vunpack.c.h.b16 %v321
    %v414 = vunpack.c.l.b16 %v322
    %v415 = vunpack.c.h.b16 %v322
    %v416 = vunpack.c.l.b16 %v323
    %v417 = vunpack.c.h.b16 %v323
    %v418 = vunpack.c.l.b16 %v324
    %v419 = vunpack.c.h.b16 %v324
    %v420 = vunpack.c.l.b16 %v325
    %v421 = vunpack.c.h.b16 %v325
    %v422 = vunpack.c.l.b16 %v326
    %v423 = vunpack.c.h.b16 %v326
    %v424 = vunpack.c.l.b16 %v327
    %v425 = vunpack.c.h.b16 %v327
    %v426 = vunpack.c.l.b16 %v328
    %v427 = vunpack.c.h.b16 %v328
    %v428 = vunpack.c.l.b16 %v329
    %v429 = vunpack.c.h.b16 %v329
    %v430 = vunpack.c.l.b16 %v330
    %v431 = vunpack.c.h.b16 %v330
    %v432 = vunpack.c.l.b16 %v331
    %v433 = vunpack.c.h.b16 %v331
    %v434 = vunpack.c.l.b16 %v332
    %v435 = vunpack.c.h.b16 %v332
    %v436 = vunpack.c.l.b16 %v333
    %v437 = vunpack.c.h.b16 %v333
    %v438 = vunpack.c.l.b16 %v334
    %v439 = vunpack.c.h.b16 %v334
    %v440 = vunpack.c.l.b16 %v335
    %v441 = vunpack.c.h.b16 %v335
    %v442 = vunpack.c.l.b16 %v336
    %v443 = vunpack.c.h.b16 %v336
    %v444 = vunpack.c.l.b16 %v337
    %v445 = vunpack.c.h.b16 %v337
    %v446 = vpack.c.b16 %v384, %v382
    %v447 = vpack.c.b16 %v385, %v383
    %v448 = vpack.c.b16 %v388, %v386
    %v449 = vpack.c.b16 %v389, %v387
    %v450 = vpack.c.b16 %v392, %v390
    %v451 = vpack.c.b16 %v393, %v391
    %v452 = vpack.c.b16 %v396, %v394
    %v453 = vpack.c.b16 %v397, %v395
    %v454 = vpack.c.b16 %v400, %v398
    %v455 = vpack.c.b16 %v401, %v399
    %v456 = vpack.c.b16 %v404, %v402
    %v457 = vpack.c.b16 %v405, %v403
    %v458 = vpack.c.b16 %v408, %v406
    %v459 = vpack.c.b16 %v409, %v407
    %v460 = vpack.c.b16 %v412, %v410
    %v461 = vpack.c.b16 %v413, %v411
    %v462 = vpack.c.b16 %v416, %v414
    %v463 = vpack.c.b16 %v417, %v415
    %v464 = vpack.c.b16 %v420, %v418
    %v465 = vpack.c.b16 %v421, %v419
    %v466 = vpack.c.b16 %v424, %v422
    %v467 = vpack.c.b16 %v425, %v423
    %v468 = vpack.c.b16 %v428, %v426
    %v469 = vpack.c.b16 %v429, %v427
    %v470 = vpack.c.b16 %v432, %v430
    %v471 = vpack.c.b16 %v433, %v431
    %v472 = vpack.c.b16 %v436, %v434
    %v473 = vpack.c.b16 %v437, %v435
    %v474 = vpack.c.b16 %v440, %v438
    %v475 = vpack.c.b16 %v441, %v439
    %v476 = vpack.c.b16 %v444, %v442
    %v477 = vpack.c.b16 %v445, %v443
    %510 = vmatprep.subr.bf16.mxu0 %v461
    %511 = vmatpush1.bf16.msra.mxu0 %v460
    %512 = vmatprep.subr.bf16.mxu0 %v459
    %513 = vmatpush1.bf16.msra.mxu0 %v458
    %514 = vmatprep.subr.bf16.mxu0 %v457
    %515 = vmatpush1.bf16.msra.mxu0 %v456
    %516 = vmatprep.subr.bf16.mxu0 %v455
    %517 = vmatpush1.bf16.msra.mxu0 %v454
    %518 = vmatprep.subr.bf16.mxu0 %v453
    %519 = vmatpush1.bf16.msra.mxu0 %v452
    %520 = vmatprep.subr.bf16.mxu0 %v451
    %521 = vmatpush1.bf16.msra.mxu0 %v450
    %522 = vmatprep.subr.bf16.mxu0 %v449
    %523 = vmatpush1.bf16.msra.mxu0 %v448
    %524 = vmatprep.subr.bf16.mxu0 %v447
    %525 = vmatpush1.bf16.msra.mxu0 %v446
    %526 = vmatprep.subr.bf16.mxu0 %v477
    %527 = vmatpush2.bf16.msra.mxu0 %v476
    %528 = vmatprep.subr.bf16.mxu0 %v475
    %529 = vmatpush2.bf16.msra.mxu0 %v474
    %530 = vmatprep.subr.bf16.mxu0 %v473
    %531 = vmatpush2.bf16.msra.mxu0 %v472
    %532 = vmatprep.subr.bf16.mxu0 %v471
    %533 = vmatpush2.bf16.msra.mxu0 %v470
    %534 = vmatprep.subr.bf16.mxu0 %v469
    %535 = vmatpush2.bf16.msra.mxu0 %v468
    %536 = vmatprep.subr.bf16.mxu0 %v467
    %537 = vmatpush2.bf16.msra.mxu0 %v466
    %538 = vmatprep.subr.bf16.mxu0 %v465
    %539 = vmatpush2.bf16.msra.mxu0 %v464
    %540 = vmatprep.subr.bf16.mxu0 %v463
    %541 = vmatpush2.bf16.msra.mxu0 %v462
    %542 = vmatprep.mubr.bf16.mxu0 %v305
    %543 = vmatmul.mubr.bf16.gmra.mxu0 %v304
    %v544 = vpop.f32.mrf.mxu0
    %v545 = vadd.f32 %v343, %v544
    %v546 = vpop.f32.mrf.mxu0
    %v547 = vadd.f32 %v347, %v546
    %v548 = vpop.f32.mrf.mxu0
    %v549 = vpop.f32.mrf.mxu0
    %550 = vdwg.mxu0
    %v551 = vmax.f32 %v545, 0.0
    %v552 = vmax.f32 %v547, 0.0
    %v553 = vpack.c.bf16 %v551, %v551
    %v554 = vpack.c.bf16 %v552, %v552
    %v555 = vld [vmem:[#allocation9] sm:$0xff]
    %v556 = vld [vmem:[#allocation9 + $0x8] sm:$0xff]
    %v557 = vld [vmem:[#allocation9 + $0x10] sm:$0xff]
    %v558 = vld [vmem:[#allocation9 + $0x18] sm:$0xff]
    %v559 = vld [vmem:[#allocation9 + $0x20] sm:$0xff]
    %v560 = vld [vmem:[#allocation9 + $0x28] sm:$0xff]
    %v561 = vld [vmem:[#allocation9 + $0x30] sm:$0xff]
    %v562 = vld [vmem:[#allocation9 + $0x38] sm:$0xff]
    %v563 = vld [vmem:[#allocation9 + $0x40] sm:$0xff]
    %v564 = vld [vmem:[#allocation9 + $0x48] sm:$0xff]
    %v565 = vld [vmem:[#allocation9 + $0x50] sm:$0xff]
    %v566 = vld [vmem:[#allocation9 + $0x58] sm:$0xff]
    %v567 = vld [vmem:[#allocation9 + $0x60] sm:$0xff]
    %v568 = vld [vmem:[#allocation9 + $0x68] sm:$0xff]
    %v569 = vld [vmem:[#allocation9 + $0x70] sm:$0xff]
    %v570 = vld [vmem:[#allocation9 + $0x78] sm:$0xff]
    %v571 = vld [vmem:[#allocation9 + $0x80] sm:$0xff]
    %v572 = vld [vmem:[#allocation9 + $0x88] sm:$0xff]
    %v573 = vld [vmem:[#allocation9 + $0x90] sm:$0xff]
    %v574 = vld [vmem:[#allocation9 + $0x98] sm:$0xff]
    %v575 = vld [vmem:[#allocation9 + $0xa0] sm:$0xff]
    %v576 = vld [vmem:[#allocation9 + $0xa8] sm:$0xff]
    %v577 = vld [vmem:[#allocation9 + $0xb0] sm:$0xff]
    %v578 = vld [vmem:[#allocation9 + $0xb8] sm:$0xff]
    %v579 = vld [vmem:[#allocation9 + $0xc0] sm:$0xff]
    %v580 = vld [vmem:[#allocation9 + $0xc8] sm:$0xff]
    %v581 = vld [vmem:[#allocation9 + $0xd0] sm:$0xff]
    %v582 = vld [vmem:[#allocation9 + $0xd8] sm:$0xff]
    %v583 = vld [vmem:[#allocation9 + $0xe0] sm:$0xff]
    %v584 = vld [vmem:[#allocation9 + $0xe8] sm:$0xff]
    %v585 = vld [vmem:[#allocation9 + $0xf0] sm:$0xff]
    %v586 = vld [vmem:[#allocation9 + $0xf8] sm:$0xff]
    %v587 = vld [vmem:[%s8] sm:$0x3]
    %v589 = vlaneseq
    %v590 = vshrl.u32 %v589, 7
    %v591 = vsub.s32 0, %v590
    %v592 = vrot.slane %v587, %v591
    %v593 = vlaneseq
    %v594 = vshrl.u32 %v593, 7
    %v595 = vsub.s32 1, %v594
    %v596 = vrot.slane %v587, %v595
    %v631 = vunpack.c.l.b16 %v555
    %v632 = vunpack.c.h.b16 %v555
    %v633 = vunpack.c.l.b16 %v556
    %v634 = vunpack.c.h.b16 %v556
    %v635 = vunpack.c.l.b16 %v557
    %v636 = vunpack.c.h.b16 %v557
    %v637 = vunpack.c.l.b16 %v558
    %v638 = vunpack.c.h.b16 %v558
    %v639 = vunpack.c.l.b16 %v559
    %v640 = vunpack.c.h.b16 %v559
    %v641 = vunpack.c.l.b16 %v560
    %v642 = vunpack.c.h.b16 %v560
    %v643 = vunpack.c.l.b16 %v561
    %v644 = vunpack.c.h.b16 %v561
    %v645 = vunpack.c.l.b16 %v562
    %v646 = vunpack.c.h.b16 %v562
    %v647 = vunpack.c.l.b16 %v563
    %v648 = vunpack.c.h.b16 %v563
    %v649 = vunpack.c.l.b16 %v564
    %v650 = vunpack.c.h.b16 %v564
    %v651 = vunpack.c.l.b16 %v565
    %v652 = vunpack.c.h.b16 %v565
    %v653 = vunpack.c.l.b16 %v566
    %v654 = vunpack.c.h.b16 %v566
    %v655 = vunpack.c.l.b16 %v567
    %v656 = vunpack.c.h.b16 %v567
    %v657 = vunpack.c.l.b16 %v568
    %v658 = vunpack.c.h.b16 %v568
    %v659 = vunpack.c.l.b16 %v569
    %v660 = vunpack.c.h.b16 %v569
    %v661 = vunpack.c.l.b16 %v570
    %v662 = vunpack.c.h.b16 %v570
    %v663 = vunpack.c.l.b16 %v571
    %v664 = vunpack.c.h.b16 %v571
    %v665 = vunpack.c.l.b16 %v572
    %v666 = vunpack.c.h.b16 %v572
    %v667 = vunpack.c.l.b16 %v573
    %v668 = vunpack.c.h.b16 %v573
    %v669 = vunpack.c.l.b16 %v574
    %v670 = vunpack.c.h.b16 %v574
    %v671 = vunpack.c.l.b16 %v575
    %v672 = vunpack.c.h.b16 %v575
    %v673 = vunpack.c.l.b16 %v576
    %v674 = vunpack.c.h.b16 %v576
    %v675 = vunpack.c.l.b16 %v577
    %v676 = vunpack.c.h.b16 %v577
    %v677 = vunpack.c.l.b16 %v578
    %v678 = vunpack.c.h.b16 %v578
    %v679 = vunpack.c.l.b16 %v579
    %v680 = vunpack.c.h.b16 %v579
    %v681 = vunpack.c.l.b16 %v580
    %v682 = vunpack.c.h.b16 %v580
    %v683 = vunpack.c.l.b16 %v581
    %v684 = vunpack.c.h.b16 %v581
    %v685 = vunpack.c.l.b16 %v582
    %v686 = vunpack.c.h.b16 %v582
    %v687 = vunpack.c.l.b16 %v583
    %v688 = vunpack.c.h.b16 %v583
    %v689 = vunpack.c.l.b16 %v584
    %v690 = vunpack.c.h.b16 %v584
    %v691 = vunpack.c.l.b16 %v585
    %v692 = vunpack.c.h.b16 %v585
    %v693 = vunpack.c.l.b16 %v586
    %v694 = vunpack.c.h.b16 %v586
    %v695 = vpack.c.b16 %v633, %v631
    %v696 = vpack.c.b16 %v634, %v632
    %v697 = vpack.c.b16 %v637, %v635
    %v698 = vpack.c.b16 %v638, %v636
    %v699 = vpack.c.b16 %v641, %v639
    %v700 = vpack.c.b16 %v642, %v640
    %v701 = vpack.c.b16 %v645, %v643
    %v702 = vpack.c.b16 %v646, %v644
    %v703 = vpack.c.b16 %v649, %v647
    %v704 = vpack.c.b16 %v650, %v648
    %v705 = vpack.c.b16 %v653, %v651
    %v706 = vpack.c.b16 %v654, %v652
    %v707 = vpack.c.b16 %v657, %v655
    %v708 = vpack.c.b16 %v658, %v656
    %v709 = vpack.c.b16 %v661, %v659
    %v710 = vpack.c.b16 %v662, %v660
    %v711 = vpack.c.b16 %v665, %v663
    %v712 = vpack.c.b16 %v666, %v664
    %v713 = vpack.c.b16 %v669, %v667
    %v714 = vpack.c.b16 %v670, %v668
    %v715 = vpack.c.b16 %v673, %v671
    %v716 = vpack.c.b16 %v674, %v672
    %v717 = vpack.c.b16 %v677, %v675
    %v718 = vpack.c.b16 %v678, %v676
    %v719 = vpack.c.b16 %v681, %v679
    %v720 = vpack.c.b16 %v682, %v680
    %v721 = vpack.c.b16 %v685, %v683
    %v722 = vpack.c.b16 %v686, %v684
    %v723 = vpack.c.b16 %v689, %v687
    %v724 = vpack.c.b16 %v690, %v688
    %v725 = vpack.c.b16 %v693, %v691
    %v726 = vpack.c.b16 %v694, %v692
    %759 = vmatprep.subr.bf16.mxu0 %v710
    %760 = vmatpush1.bf16.msra.mxu0 %v709
    %761 = vmatprep.subr.bf16.mxu0 %v708
    %762 = vmatpush1.bf16.msra.mxu0 %v707
    %763 = vmatprep.subr.bf16.mxu0 %v706
    %764 = vmatpush1.bf16.msra.mxu0 %v705
    %765 = vmatprep.subr.bf16.mxu0 %v704
    %766 = vmatpush1.bf16.msra.mxu0 %v703
    %767 = vmatprep.subr.bf16.mxu0 %v702
    %768 = vmatpush1.bf16.msra.mxu0 %v701
    %769 = vmatprep.subr.bf16.mxu0 %v700
    %770 = vmatpush1.bf16.msra.mxu0 %v699
    %771 = vmatprep.subr.bf16.mxu0 %v698
    %772 = vmatpush1.bf16.msra.mxu0 %v697
    %773 = vmatprep.subr.bf16.mxu0 %v696
    %774 = vmatpush1.bf16.msra.mxu0 %v695
    %775 = vmatprep.subr.bf16.mxu0 %v726
    %776 = vmatpush2.bf16.msra.mxu0 %v725
    %777 = vmatprep.subr.bf16.mxu0 %v724
    %778 = vmatpush2.bf16.msra.mxu0 %v723
    %779 = vmatprep.subr.bf16.mxu0 %v722
    %780 = vmatpush2.bf16.msra.mxu0 %v721
    %781 = vmatprep.subr.bf16.mxu0 %v720
    %782 = vmatpush2.bf16.msra.mxu0 %v719
    %783 = vmatprep.subr.bf16.mxu0 %v718
    %784 = vmatpush2.bf16.msra.mxu0 %v717
    %785 = vmatprep.subr.bf16.mxu0 %v716
    %786 = vmatpush2.bf16.msra.mxu0 %v715
    %787 = vmatprep.subr.bf16.mxu0 %v714
    %788 = vmatpush2.bf16.msra.mxu0 %v713
    %789 = vmatprep.subr.bf16.mxu0 %v712
    %790 = vmatpush2.bf16.msra.mxu0 %v711
    %791 = vmatprep.mubr.bf16.mxu0 %v554
    %792 = vmatmul.mubr.bf16.gmra.mxu0 %v553
    %v793 = vpop.f32.mrf.mxu0
    %v794 = vadd.f32 %v592, %v793
    %v795 = vpop.f32.mrf.mxu0
    %v796 = vadd.f32 %v596, %v795
    %v797 = vpop.f32.mrf.mxu0
    %v798 = vpop.f32.mrf.mxu0
    %799 = vdwg.mxu0
    %v800 = vmax.f32 %v794, 0.0
    %v801 = vmax.f32 %v796, 0.0
    %v802 = vpack.c.bf16 %v800, %v800
    %v803 = vpack.c.bf16 %v801, %v801
    %v804 = vld [vmem:[#allocation10] sm:$0xf]
    %v805 = vld [vmem:[#allocation10 + $0x4] sm:$0xf]
    %v806 = vld [vmem:[#allocation10 + $0x8] sm:$0xf]
    %v807 = vld [vmem:[#allocation10 + $0xc] sm:$0xf]
    %v808 = vld [vmem:[#allocation10 + $0x10] sm:$0xf]
    %v809 = vld [vmem:[#allocation10 + $0x14] sm:$0xf]
    %v810 = vld [vmem:[#allocation10 + $0x18] sm:$0xf]
    %v811 = vld [vmem:[#allocation10 + $0x1c] sm:$0xf]
    %v812 = vld [vmem:[#allocation10 + $0x20] sm:$0xf]
    %v813 = vld [vmem:[#allocation10 + $0x24] sm:$0xf]
    %v814 = vld [vmem:[#allocation10 + $0x28] sm:$0xf]
    %v815 = vld [vmem:[#allocation10 + $0x2c] sm:$0xf]
    %v816 = vld [vmem:[#allocation10 + $0x30] sm:$0xf]
    %v817 = vld [vmem:[#allocation10 + $0x34] sm:$0xf]
    %v818 = vld [vmem:[#allocation10 + $0x38] sm:$0xf]
    %v819 = vld [vmem:[#allocation10 + $0x3c] sm:$0xf]
    %v820 = vld [vmem:[#allocation10 + $0x40] sm:$0xf]
    %v821 = vld [vmem:[#allocation10 + $0x44] sm:$0xf]
    %v822 = vld [vmem:[#allocation10 + $0x48] sm:$0xf]
    %v823 = vld [vmem:[#allocation10 + $0x4c] sm:$0xf]
    %v824 = vld [vmem:[#allocation10 + $0x50] sm:$0xf]
    %v825 = vld [vmem:[#allocation10 + $0x54] sm:$0xf]
    %v826 = vld [vmem:[#allocation10 + $0x58] sm:$0xf]
    %v827 = vld [vmem:[#allocation10 + $0x5c] sm:$0xf]
    %v828 = vld [vmem:[#allocation10 + $0x60] sm:$0xf]
    %v829 = vld [vmem:[#allocation10 + $0x64] sm:$0xf]
    %v830 = vld [vmem:[#allocation10 + $0x68] sm:$0xf]
    %v831 = vld [vmem:[#allocation10 + $0x6c] sm:$0xf]
    %v832 = vld [vmem:[#allocation10 + $0x70] sm:$0xf]
    %v833 = vld [vmem:[#allocation10 + $0x74] sm:$0xf]
    %v834 = vld [vmem:[#allocation10 + $0x78] sm:$0xf]
    %v835 = vld [vmem:[#allocation10 + $0x7c] sm:$0xf]
    %v836 = vld [vmem:[%s10] sm:$0x1]
    %v838 = vlaneseq
    %v839 = vshrl.u32 %v838, 7
    %v840 = vsub.s32 0, %v839
    %v841 = vrot.slane %v836, %v840
    %v875 = vunpack.c.l.b16 %v804
    %v876 = vunpack.c.l.b16 %v805
    %v877 = vunpack.c.l.b16 %v806
    %v878 = vunpack.c.l.b16 %v807
    %v879 = vunpack.c.l.b16 %v808
    %v880 = vunpack.c.l.b16 %v809
    %v881 = vunpack.c.l.b16 %v810
    %v882 = vunpack.c.l.b16 %v811
    %v883 = vunpack.c.l.b16 %v812
    %v884 = vunpack.c.l.b16 %v813
    %v885 = vunpack.c.l.b16 %v814
    %v886 = vunpack.c.l.b16 %v815
    %v887 = vunpack.c.l.b16 %v816
    %v888 = vunpack.c.l.b16 %v817
    %v889 = vunpack.c.l.b16 %v818
    %v890 = vunpack.c.l.b16 %v819
    %v891 = vunpack.c.l.b16 %v820
    %v892 = vunpack.c.l.b16 %v821
    %v893 = vunpack.c.l.b16 %v822
    %v894 = vunpack.c.l.b16 %v823
    %v895 = vunpack.c.l.b16 %v824
    %v896 = vunpack.c.l.b16 %v825
    %v897 = vunpack.c.l.b16 %v826
    %v898 = vunpack.c.l.b16 %v827
    %v899 = vunpack.c.l.b16 %v828
    %v900 = vunpack.c.l.b16 %v829
    %v901 = vunpack.c.l.b16 %v830
    %v902 = vunpack.c.l.b16 %v831
    %v903 = vunpack.c.l.b16 %v832
    %v904 = vunpack.c.l.b16 %v833
    %v905 = vunpack.c.l.b16 %v834
    %v906 = vunpack.c.l.b16 %v835
    %v907 = vpack.c.b16 %v876, %v875
    %v908 = vpack.c.b16 %v878, %v877
    %v909 = vpack.c.b16 %v880, %v879
    %v910 = vpack.c.b16 %v882, %v881
    %v911 = vpack.c.b16 %v884, %v883
    %v912 = vpack.c.b16 %v886, %v885
    %v913 = vpack.c.b16 %v888, %v887
    %v914 = vpack.c.b16 %v890, %v889
    %v915 = vpack.c.b16 %v892, %v891
    %v916 = vpack.c.b16 %v894, %v893
    %v917 = vpack.c.b16 %v896, %v895
    %v918 = vpack.c.b16 %v898, %v897
    %v919 = vpack.c.b16 %v900, %v899
    %v920 = vpack.c.b16 %v902, %v901
    %v921 = vpack.c.b16 %v904, %v903
    %v922 = vpack.c.b16 %v906, %v905
    %939 = vmatprep.subr.bf16.mxu0 0
    %940 = vmatpush1.bf16.msra.mxu0 %v914
    %941 = vmatprep.subr.bf16.mxu0 0
    %942 = vmatpush1.bf16.msra.mxu0 %v913
    %943 = vmatprep.subr.bf16.mxu0 0
    %944 = vmatpush1.bf16.msra.mxu0 %v912
    %945 = vmatprep.subr.bf16.mxu0 0
    %946 = vmatpush1.bf16.msra.mxu0 %v911
    %947 = vmatprep.subr.bf16.mxu0 0
    %948 = vmatpush1.bf16.msra.mxu0 %v910
    %949 = vmatprep.subr.bf16.mxu0 0
    %950 = vmatpush1.bf16.msra.mxu0 %v909
    %951 = vmatprep.subr.bf16.mxu0 0
    %952 = vmatpush1.bf16.msra.mxu0 %v908
    %953 = vmatprep.subr.bf16.mxu0 0
    %954 = vmatpush1.bf16.msra.mxu0 %v907
    %955 = vmatprep.subr.bf16.mxu0 0
    %956 = vmatpush2.bf16.msra.mxu0 %v922
    %957 = vmatprep.subr.bf16.mxu0 0
    %958 = vmatpush2.bf16.msra.mxu0 %v921
    %959 = vmatprep.subr.bf16.mxu0 0
    %960 = vmatpush2.bf16.msra.mxu0 %v920
    %961 = vmatprep.subr.bf16.mxu0 0
    %962 = vmatpush2.bf16.msra.mxu0 %v919
    %963 = vmatprep.subr.bf16.mxu0 0
    %964 = vmatpush2.bf16.msra.mxu0 %v918
    %965 = vmatprep.subr.bf16.mxu0 0
    %966 = vmatpush2.bf16.msra.mxu0 %v917
    %967 = vmatprep.subr.bf16.mxu0 0
    %968 = vmatpush2.bf16.msra.mxu0 %v916
    %969 = vmatprep.subr.bf16.mxu0 0
    %970 = vmatpush2.bf16.msra.mxu0 %v915
    %971 = vmatprep.mubr.bf16.mxu0 %v803
    %972 = vmatmul.mubr.bf16.gmra.mxu0 %v802
    %v973 = vpop.f32.mrf.mxu0
    %v974 = vadd.f32 %v841, %v973
    %v975 = vpop.f32.mrf.mxu0
    %v976 = vpop.f32.mrf.mxu0
    %v977 = vpop.f32.mrf.mxu0
    %978 = vdwg.mxu0
    %v979 = vmul.f32 %v974, -0.020202707
    %v980 = vmul.f32 %v979, 1.442695
    %v981 = vpow.pop %v980
    %v982 = vsub.f32 %v981, 1.0
    %v983 = vmul.f32 %v982, 50.0
    %984 = vst [vmem:[%s11] sm:$0xff] %v983
    // Predicated region
    $region70: #{dist_critic_forward.1} parent=1 // pred_check
      _
    $region71: #{dist_critic_forward.1} parent=1 // pred_check_branch
      %986 = sbr.rel (0) target = $region73
    $region72: #{dist_critic_forward.1} parent=1 // pred_region
      _
    $region73: #{dist_critic_forward.1} parent=1 // pred_fallthru
      _
    // Predicated region
    $region74: #{dist_critic_forward.1} parent=1 // pred_check
      _
    $region75: #{dist_critic_forward.1} parent=1 // pred_check_branch
      %988 = sbr.rel (0) target = $region77
    $region76: #{dist_critic_forward.1} parent=1 // pred_region
      _
    $region77: #{dist_critic_forward.1} parent=1 // pred_fallthru
      _
    %989 = vsyncpa [#allocation3], 1
    %990 = vsyncpa [#allocation5], 1
    %991 = vsyncpa [#allocation8], 1
    %992 = vsyncpa [#allocation11], 1

</llo_original>
